<compile_context>
chip_gen: v7x
topology: tpu7x:2x2x1
jax: 0.10.0
libtpu: 0.0.40
codegen_flags: <defaults>
</compile_context>

<pallas_src>
import numpy as np

import jax
import jax.numpy as jnp
from jax import lax
from jax.experimental import pallas as pl
from jax.experimental.pallas import tpu as pltpu


def rcab_kernel(x_ref, m1_ref, b1_ref, m2_ref, b2_ref,
                w3t_ref, b3_ref, w4_ref, b4_ref, out_ref):
    # x_ref  : (N, H, WC)  lane-dense f32 input (residual source)
    # m1/m2  : (3, WC, WC) bf16 band conv matrices (ky = 0/1/2); b1/b2: (1, WC)
    # w3t    : (Cr, WC)    f32 squeeze weight, 1/(H*W) pool scale folded in
    # b3     : (Cr, 1)     f32
    # w4     : (Cr, WC)    f32 excite weight (lane-tiled); b4: (1, WC)
    # out    : (N, H, WC)
    N, H, WC = x_ref.shape
    NH = N * H

    x3 = x_ref[...]                                   # (N, H, WC)
    x = x3.reshape(NH, WC)                            # batch folded into MXU M dim

    row = lax.broadcasted_iota(jnp.int32, (NH, WC), 0)
    top = (row % H) == 0                              # first row of each image
    bot = (row % H) == (H - 1)                        # last row of each image

    def conv3x3(a, m_ref, b_ref):
        # Vertical taps as row-shifted copies; rows shifted across an image
        # boundary (or the wrap-around) are zeroed -> "same" zero padding.
        up = jnp.where(top, 0.0, pltpu.roll(a, shift=1, axis=0))          # a[h-1]
        down = jnp.where(bot, 0.0, pltpu.roll(a, shift=NH - 1, axis=0))   # a[h+1]
        # Three accumulated bf16 K=WC dots (horizontal taps + padding are baked
        # into the band blocks); f32 accumulation.
        acc = jnp.dot(up.astype(jnp.bfloat16), m_ref[0],
                      preferred_element_type=jnp.float32)
        acc = acc + jnp.dot(a.astype(jnp.bfloat16), m_ref[1],
                            preferred_element_type=jnp.float32)
        acc = acc + jnp.dot(down.astype(jnp.bfloat16), m_ref[2],
                            preferred_element_type=jnp.float32)
        return acc + b_ref[...]

    # conv1 -> SiLU -> conv2
    h1 = jax.nn.silu(conv3x3(x, m1_ref, b1_ref))      # (NH, WC)
    h2 = conv3x3(h1, m2_ref, b2_ref)                  # (NH, WC)
    h2_3 = h2.reshape(N, H, WC)

    # Channel attention, entirely on VPU/XLU (M=N, Cr tiny -> skip the MXU).
    # Global avg pool: per-image sublane sum; 1/(H*W) is folded into w3t.
    pooled = jnp.sum(h2_3, axis=1, keepdims=True)                       # (N, 1, WC)
    mid3 = jax.nn.silu(
        jnp.sum(pooled * w3t_ref[...][None, :, :], axis=2, keepdims=True)
        + b3_ref[...][None, :, :])                                      # (N, Cr, 1)
    attn = jax.nn.sigmoid(
        jnp.sum(mid3 * w4_ref[...][None, :, :], axis=1, keepdims=True)
        + b4_ref[...][None, :, :])                                      # (N, 1, WC)

    # Residual add + per-image channel scale; lane-dense (last dim = WC) store.
    out_ref[...] = x3 + h2_3 * attn


def _make_band_weight(w_hwio, W):
    """(3, 3, Cin, Cout) HWIO 'same' conv -> (3, W*Cin, W*Cout) band blocks.

    Block ky, row w_in*Cin + ci, col w_out*Cout + co holds w[ky, kx, ci, co]
    with kx = w_in - w_out + 1 when 0 <= kx < 3 and 0 <= w_in < W; horizontal
    zero padding is implicit (missing bands).
    """
    Cin, Cout = w_hwio.shape[2], w_hwio.shape[3]
    sel = np.zeros((3, W, W), np.float32)              # (kx, w_in, w_out)
    for kx in range(3):
        for wo in range(W):
            wi = wo + kx - 1
            if 0 <= wi < W:
                sel[kx, wi, wo] = 1.0
    m = jnp.einsum("aio,yacd->yicod", jnp.asarray(sel), w_hwio)   # (3,W,Cin,W,Cout)
    return m.reshape(3, W * Cin, W * Cout)


def preprocess_params(params, H, W):
    """Per-checkpoint weight prep. Run ONCE and reuse across calls."""
    w1, b1, w2, b2, w3, b3, w4, b4 = params
    m1 = _make_band_weight(w1, W).astype(jnp.bfloat16)   # (3, WC, WC) bf16
    m2 = _make_band_weight(w2, W).astype(jnp.bfloat16)
    b1d = jnp.tile(b1, (1, W))                           # (1, WC)
    b2d = jnp.tile(b2, (1, W))
    w3t = jnp.tile(w3.T, (1, W)) * (1.0 / (H * W))       # (Cr, WC), pool folded in
    b3d = b3.reshape(-1, 1)                              # (Cr, 1)
    w4d = jnp.tile(w4, (1, W))                           # (Cr, WC)
    b4d = jnp.tile(b4, (1, W))                           # (1, WC)
    return (m1, b1d, m2, b2d, w3t, b3d, w4d, b4d)


@jax.jit
def rcab_pallas(x_nhwc, prepped):
    m1, b1d, m2, b2d, w3t, b3d, w4d, b4d = prepped
    N, H, W, C = x_nhwc.shape
    WC = W * C
    x_d = x_nhwc.reshape(N, H, WC)                       # lane-dense view of x

    vmem = lambda: pl.BlockSpec(memory_space=pltpu.MemorySpace.VMEM)
    out_d = pl.pallas_call(
        rcab_kernel,
        out_shape=jax.ShapeDtypeStruct((N, H, WC), jnp.float32),
        in_specs=[vmem() for _ in range(9)],
        out_specs=vmem(),
    )(x_d, m1, b1d, m2, b2d, w3t, b3d, w4d, b4d)

    return out_d.reshape(N, H, W, C)


def rcab_reference(x_nhwc, params):
    """Pure-JAX f32 reference mirroring the PyTorch RCAB forward."""
    w1, b1, w2, b2, w3, b3, w4, b4 = params
    dn = ("NHWC", "HWIO", "NHWC")
    h1 = jax.nn.silu(
        lax.conv_general_dilated(x_nhwc, w1, (1, 1), "SAME",
                                 dimension_numbers=dn) + b1)
    h2 = lax.conv_general_dilated(h1, w2, (1, 1), "SAME",
                                  dimension_numbers=dn) + b2
    pooled = jnp.mean(h2, axis=(1, 2), keepdims=True)             # (N,1,1,C)
    mid = jax.nn.silu(jnp.einsum("nijc,cr->nijr", pooled, w3) + b3)
    attn = jax.nn.sigmoid(jnp.einsum("nijr,rc->nijc", mid, w4) + b4)
    return x_nhwc + h2 * attn


def make_params(key, num_features, reduction):
    C = num_features
    Cr = num_features // reduction
    ks = jax.random.split(key, 8)
    scale = 0.1
    w1 = scale * jax.random.normal(ks[0], (3, 3, C, C), jnp.float32)   # HWIO
    b1 = scale * jax.random.normal(ks[1], (1, C), jnp.float32)
    w2 = scale * jax.random.normal(ks[2], (3, 3, C, C), jnp.float32)
    b2 = scale * jax.random.normal(ks[3], (1, C), jnp.float32)
    w3 = scale * jax.random.normal(ks[4], (C, Cr), jnp.float32)        # 1x1: C -> C/r
    b3 = scale * jax.random.normal(ks[5], (1, Cr), jnp.float32)
    w4 = scale * jax.random.normal(ks[6], (Cr, C), jnp.float32)        # 1x1: C/r -> C
    b4 = scale * jax.random.normal(ks[7], (1, C), jnp.float32)
    return (w1, b1, w2, b2, w3, b3, w4, b4)


if __name__ == "__main__":
    # RCAB(num_features=8, reduction=4, ndim=2); input NCHW = (2, 8, 16, 16)
    N, C, H, W = 2, 8, 16, 16
    reduction = 4

    key = jax.random.PRNGKey(0)
    kx, kp = jax.random.split(key)
    x_nchw = jax.random.normal(kx, (N, C, H, W), jnp.float32)
    params = make_params(kp, C, reduction)

    # NCHW (PyTorch) -> NHWC (kernel layout)
    x_nhwc = jnp.transpose(x_nchw, (0, 2, 3, 1))

    # Per-checkpoint weight prep, hoisted out of the per-call (jitted) path.
    prepped = preprocess_params(params, H, W)

    out = rcab_pallas(x_nhwc, prepped)
    out = jax.block_until_ready(out)

    ref = jax.block_until_ready(rcab_reference(x_nhwc, params))

    assert out.shape == (N, H, W, C)
    max_err = float(jnp.max(jnp.abs(out - ref)))
    # bf16 conv weights/activations on the MXU -> relaxed tolerance vs f32 ref.
    assert jnp.allclose(out, ref, atol=2e-2, rtol=2e-2), max_err

    # back to NCHW to match the PyTorch module's output convention
    out_nchw = jnp.transpose(out, (0, 3, 1, 2))
    assert out_nchw.shape == x_nchw.shape

    print("KERNEL_OK")
</pallas_src>

<mosaic_0001>
module attributes {stable_mosaic.version = 11 : i64} {
  func.func @rcab_kernel(%arg0: memref<2x16x128xf32, #tpu.memory_space<vmem>>, %arg1: memref<3x128x128xbf16, #tpu.memory_space<vmem>>, %arg2: memref<1x128xf32, #tpu.memory_space<vmem>>, %arg3: memref<3x128x128xbf16, #tpu.memory_space<vmem>>, %arg4: memref<1x128xf32, #tpu.memory_space<vmem>>, %arg5: memref<2x128xf32, #tpu.memory_space<vmem>>, %arg6: memref<2x1xf32, #tpu.memory_space<vmem>>, %arg7: memref<2x128xf32, #tpu.memory_space<vmem>>, %arg8: memref<1x128xf32, #tpu.memory_space<vmem>>, %arg9: memref<2x16x128xf32, #tpu.memory_space<vmem>>) attributes {dimension_semantics = [], scalar_prefetch = 0 : i64, scratch_operands = 0 : i64, tpu.core_type = #tpu.core_type<tc>} {
    %c0 = arith.constant 0 : index
    %c0_0 = arith.constant 0 : index
    %c0_1 = arith.constant 0 : index
    %0 = vector.load %arg0[%c0, %c0_0, %c0_1] : memref<2x16x128xf32, #tpu.memory_space<vmem>>, vector<2x16x128xf32>
    %1 = vector.shape_cast %0 : vector<2x16x128xf32> to vector<32x128xf32>
    %2 = tpu.iota {dimensions = array<i32: 0>} : vector<32x128xi32>
    %c16_i32 = arith.constant 16 : i32
    %c0_i32 = arith.constant 0 : i32
    %3 = arith.cmpi eq, %c16_i32, %c0_i32 : i32
    %c1_i32 = arith.constant 1 : i32
    %4 = arith.select %3, %c1_i32, %c16_i32 : i32
    %5 = vector.broadcast %4 : i32 to vector<32x128xi32>
    %6 = arith.remsi %2, %5 : vector<32x128xi32>
    %c0_i32_2 = arith.constant 0 : i32
    %7 = vector.broadcast %c0_i32_2 : i32 to vector<32x128xi32>
    %8 = arith.cmpi ne, %6, %7 : vector<32x128xi32>
    %c0_i32_3 = arith.constant 0 : i32
    %9 = vector.broadcast %c0_i32_3 : i32 to vector<32x128xi32>
    %10 = arith.cmpi slt, %6, %9 : vector<32x128xi32>
    %c0_i32_4 = arith.constant 0 : i32
    %11 = arith.cmpi slt, %4, %c0_i32_4 : i32
    %12 = vector.broadcast %11 : i1 to vector<32x128xi1>
    %13 = vector.broadcast %12 : vector<32x128xi1> to vector<32x128xi1>
    %14 = arith.xori %10, %13 : vector<32x128xi1>
    %15 = arith.andi %14, %8 : vector<32x128xi1>
    %16 = vector.broadcast %4 : i32 to vector<32x128xi32>
    %17 = arith.addi %6, %16 : vector<32x128xi32>
    %18 = arith.select %15, %17, %6 : vector<32x128xi1>, vector<32x128xi32>
    %c0_i32_5 = arith.constant 0 : i32
    %19 = vector.broadcast %c0_i32_5 : i32 to vector<32x128xi32>
    %20 = arith.cmpi eq, %18, %19 : vector<32x128xi32>
    %c16_i32_6 = arith.constant 16 : i32
    %c0_i32_7 = arith.constant 0 : i32
    %21 = arith.cmpi eq, %c16_i32_6, %c0_i32_7 : i32
    %c1_i32_8 = arith.constant 1 : i32
    %22 = arith.select %21, %c1_i32_8, %c16_i32_6 : i32
    %23 = vector.broadcast %22 : i32 to vector<32x128xi32>
    %24 = arith.remsi %2, %23 : vector<32x128xi32>
    %c0_i32_9 = arith.constant 0 : i32
    %25 = vector.broadcast %c0_i32_9 : i32 to vector<32x128xi32>
    %26 = arith.cmpi ne, %24, %25 : vector<32x128xi32>
    %c0_i32_10 = arith.constant 0 : i32
    %27 = vector.broadcast %c0_i32_10 : i32 to vector<32x128xi32>
    %28 = arith.cmpi slt, %24, %27 : vector<32x128xi32>
    %c0_i32_11 = arith.constant 0 : i32
    %29 = arith.cmpi slt, %22, %c0_i32_11 : i32
    %30 = vector.broadcast %29 : i1 to vector<32x128xi1>
    %31 = vector.broadcast %30 : vector<32x128xi1> to vector<32x128xi1>
    %32 = arith.xori %28, %31 : vector<32x128xi1>
    %33 = arith.andi %32, %26 : vector<32x128xi1>
    %34 = vector.broadcast %22 : i32 to vector<32x128xi32>
    %35 = arith.addi %24, %34 : vector<32x128xi32>
    %36 = arith.select %33, %35, %24 : vector<32x128xi1>, vector<32x128xi32>
    %c15_i32 = arith.constant 15 : i32
    %37 = vector.broadcast %c15_i32 : i32 to vector<32x128xi32>
    %38 = arith.cmpi eq, %36, %37 : vector<32x128xi32>
    %c1_i32_12 = arith.constant 1 : i32
    %39 = tpu.dynamic_rotate %1 by %c1_i32_12 dim 0 : vector<32x128xf32>, i32 -> vector<32x128xf32>
    %cst = arith.constant 0.000000e+00 : f32
    %40 = vector.broadcast %cst : f32 to vector<32x128xf32>
    %41 = arith.select %20, %40, %39 : vector<32x128xi1>, vector<32x128xf32>
    %c31_i32 = arith.constant 31 : i32
    %42 = tpu.dynamic_rotate %1 by %c31_i32 dim 0 : vector<32x128xf32>, i32 -> vector<32x128xf32>
    %cst_13 = arith.constant 0.000000e+00 : f32
    %43 = vector.broadcast %cst_13 : f32 to vector<32x128xf32>
    %44 = arith.select %38, %43, %42 : vector<32x128xi1>, vector<32x128xf32>
    %45 = arith.truncf %41 : vector<32x128xf32> to vector<32x128xbf16>
    %c0_14 = arith.constant 0 : index
    %c0_15 = arith.constant 0 : index
    %c0_16 = arith.constant 0 : index
    %46 = vector.load %arg1[%c0_14, %c0_15, %c0_16] : memref<3x128x128xbf16, #tpu.memory_space<vmem>>, vector<1x128x128xbf16>
    %47 = vector.shape_cast %46 : vector<1x128x128xbf16> to vector<128x128xbf16>
    %cst_17 = arith.constant dense<0.000000e+00> : vector<32x128xf32>
    %48 = tpu.matmul %45, %47, %cst_17 {dimension_numbers = #tpu.dot_dimension_numbers<[1], [0], [0], [1], [0, 0, 1, 1], [], []>} : vector<32x128xbf16>, vector<128x128xbf16>, vector<32x128xf32> -> vector<32x128xf32>
    %49 = arith.truncf %1 : vector<32x128xf32> to vector<32x128xbf16>
    %c1 = arith.constant 1 : index
    %c0_18 = arith.constant 0 : index
    %c0_19 = arith.constant 0 : index
    %50 = vector.load %arg1[%c1, %c0_18, %c0_19] : memref<3x128x128xbf16, #tpu.memory_space<vmem>>, vector<1x128x128xbf16>
    %51 = vector.shape_cast %50 : vector<1x128x128xbf16> to vector<128x128xbf16>
    %cst_20 = arith.constant dense<0.000000e+00> : vector<32x128xf32>
    %52 = tpu.matmul %49, %51, %cst_20 {dimension_numbers = #tpu.dot_dimension_numbers<[1], [0], [0], [1], [0, 0, 1, 1], [], []>} : vector<32x128xbf16>, vector<128x128xbf16>, vector<32x128xf32> -> vector<32x128xf32>
    %53 = arith.addf %48, %52 : vector<32x128xf32>
    %54 = arith.truncf %44 : vector<32x128xf32> to vector<32x128xbf16>
    %c2 = arith.constant 2 : index
    %c0_21 = arith.constant 0 : index
    %c0_22 = arith.constant 0 : index
    %55 = vector.load %arg1[%c2, %c0_21, %c0_22] : memref<3x128x128xbf16, #tpu.memory_space<vmem>>, vector<1x128x128xbf16>
    %56 = vector.shape_cast %55 : vector<1x128x128xbf16> to vector<128x128xbf16>
    %cst_23 = arith.constant dense<0.000000e+00> : vector<32x128xf32>
    %57 = tpu.matmul %54, %56, %cst_23 {dimension_numbers = #tpu.dot_dimension_numbers<[1], [0], [0], [1], [0, 0, 1, 1], [], []>} : vector<32x128xbf16>, vector<128x128xbf16>, vector<32x128xf32> -> vector<32x128xf32>
    %58 = arith.addf %53, %57 : vector<32x128xf32>
    %c0_24 = arith.constant 0 : index
    %c0_25 = arith.constant 0 : index
    %59 = vector.load %arg2[%c0_24, %c0_25] : memref<1x128xf32, #tpu.memory_space<vmem>>, vector<1x128xf32>
    %60 = vector.broadcast %59 : vector<1x128xf32> to vector<32x128xf32>
    %61 = arith.addf %58, %60 : vector<32x128xf32>
    %62 = arith.negf %61 : vector<32x128xf32>
    %63 = math.exp %62 : vector<32x128xf32>
    %cst_26 = arith.constant 1.000000e+00 : f32
    %64 = vector.broadcast %cst_26 : f32 to vector<32x128xf32>
    %65 = arith.addf %64, %63 : vector<32x128xf32>
    %66 = arith.divf %64, %65 : vector<32x128xf32>
    %67 = arith.mulf %61, %66 : vector<32x128xf32>
    %c1_i32_27 = arith.constant 1 : i32
    %68 = tpu.dynamic_rotate %67 by %c1_i32_27 dim 0 : vector<32x128xf32>, i32 -> vector<32x128xf32>
    %cst_28 = arith.constant 0.000000e+00 : f32
    %69 = vector.broadcast %cst_28 : f32 to vector<32x128xf32>
    %70 = arith.select %20, %69, %68 : vector<32x128xi1>, vector<32x128xf32>
    %c31_i32_29 = arith.constant 31 : i32
    %71 = tpu.dynamic_rotate %67 by %c31_i32_29 dim 0 : vector<32x128xf32>, i32 -> vector<32x128xf32>
    %cst_30 = arith.constant 0.000000e+00 : f32
    %72 = vector.broadcast %cst_30 : f32 to vector<32x128xf32>
    %73 = arith.select %38, %72, %71 : vector<32x128xi1>, vector<32x128xf32>
    %74 = arith.truncf %70 : vector<32x128xf32> to vector<32x128xbf16>
    %c0_31 = arith.constant 0 : index
    %c0_32 = arith.constant 0 : index
    %c0_33 = arith.constant 0 : index
    %75 = vector.load %arg3[%c0_31, %c0_32, %c0_33] : memref<3x128x128xbf16, #tpu.memory_space<vmem>>, vector<1x128x128xbf16>
    %76 = vector.shape_cast %75 : vector<1x128x128xbf16> to vector<128x128xbf16>
    %cst_34 = arith.constant dense<0.000000e+00> : vector<32x128xf32>
    %77 = tpu.matmul %74, %76, %cst_34 {dimension_numbers = #tpu.dot_dimension_numbers<[1], [0], [0], [1], [0, 0, 1, 1], [], []>} : vector<32x128xbf16>, vector<128x128xbf16>, vector<32x128xf32> -> vector<32x128xf32>
    %78 = arith.truncf %67 : vector<32x128xf32> to vector<32x128xbf16>
    %c1_35 = arith.constant 1 : index
    %c0_36 = arith.constant 0 : index
    %c0_37 = arith.constant 0 : index
    %79 = vector.load %arg3[%c1_35, %c0_36, %c0_37] : memref<3x128x128xbf16, #tpu.memory_space<vmem>>, vector<1x128x128xbf16>
    %80 = vector.shape_cast %79 : vector<1x128x128xbf16> to vector<128x128xbf16>
    %cst_38 = arith.constant dense<0.000000e+00> : vector<32x128xf32>
    %81 = tpu.matmul %78, %80, %cst_38 {dimension_numbers = #tpu.dot_dimension_numbers<[1], [0], [0], [1], [0, 0, 1, 1], [], []>} : vector<32x128xbf16>, vector<128x128xbf16>, vector<32x128xf32> -> vector<32x128xf32>
    %82 = arith.addf %77, %81 : vector<32x128xf32>
    %83 = arith.truncf %73 : vector<32x128xf32> to vector<32x128xbf16>
    %c2_39 = arith.constant 2 : index
    %c0_40 = arith.constant 0 : index
    %c0_41 = arith.constant 0 : index
    %84 = vector.load %arg3[%c2_39, %c0_40, %c0_41] : memref<3x128x128xbf16, #tpu.memory_space<vmem>>, vector<1x128x128xbf16>
    %85 = vector.shape_cast %84 : vector<1x128x128xbf16> to vector<128x128xbf16>
    %cst_42 = arith.constant dense<0.000000e+00> : vector<32x128xf32>
    %86 = tpu.matmul %83, %85, %cst_42 {dimension_numbers = #tpu.dot_dimension_numbers<[1], [0], [0], [1], [0, 0, 1, 1], [], []>} : vector<32x128xbf16>, vector<128x128xbf16>, vector<32x128xf32> -> vector<32x128xf32>
    %87 = arith.addf %82, %86 : vector<32x128xf32>
    %c0_43 = arith.constant 0 : index
    %c0_44 = arith.constant 0 : index
    %88 = vector.load %arg4[%c0_43, %c0_44] : memref<1x128xf32, #tpu.memory_space<vmem>>, vector<1x128xf32>
    %89 = vector.broadcast %88 : vector<1x128xf32> to vector<32x128xf32>
    %90 = arith.addf %87, %89 : vector<32x128xf32>
    %91 = vector.shape_cast %90 : vector<32x128xf32> to vector<2x16x128xf32>
    %cst_45 = arith.constant dense<0.000000e+00> : vector<2x128xf32>
    %92 = vector.multi_reduction <add>, %91, %cst_45 [1] : vector<2x16x128xf32> to vector<2x128xf32>
    %93 = vector.shape_cast %92 : vector<2x128xf32> to vector<2x1x128xf32>
    %c0_46 = arith.constant 0 : index
    %c0_47 = arith.constant 0 : index
    %94 = vector.load %arg5[%c0_46, %c0_47] : memref<2x128xf32, #tpu.memory_space<vmem>>, vector<2x128xf32>
    %95 = vector.shape_cast %94 : vector<2x128xf32> to vector<1x2x128xf32>
    %96 = vector.broadcast %93 : vector<2x1x128xf32> to vector<2x2x128xf32>
    %97 = vector.broadcast %95 : vector<1x2x128xf32> to vector<2x2x128xf32>
    %98 = arith.mulf %96, %97 : vector<2x2x128xf32>
    %cst_48 = arith.constant dense<0.000000e+00> : vector<2x2xf32>
    %99 = vector.multi_reduction <add>, %98, %cst_48 [2] : vector<2x2x128xf32> to vector<2x2xf32>
    %100 = vector.shape_cast %99 : vector<2x2xf32> to vector<2x2x1xf32>
    %c0_49 = arith.constant 0 : index
    %c0_50 = arith.constant 0 : index
    %101 = vector.load %arg6[%c0_49, %c0_50] : memref<2x1xf32, #tpu.memory_space<vmem>>, vector<2x1xf32>
    %102 = vector.shape_cast %101 : vector<2x1xf32> to vector<1x2x1xf32>
    %103 = vector.broadcast %102 : vector<1x2x1xf32> to vector<2x2x1xf32>
    %104 = arith.addf %100, %103 : vector<2x2x1xf32>
    %105 = arith.negf %104 : vector<2x2x1xf32>
    %106 = math.exp %105 : vector<2x2x1xf32>
    %cst_51 = arith.constant 1.000000e+00 : f32
    %107 = vector.broadcast %cst_51 : f32 to vector<2x2x1xf32>
    %108 = arith.addf %107, %106 : vector<2x2x1xf32>
    %109 = arith.divf %107, %108 : vector<2x2x1xf32>
    %110 = arith.mulf %104, %109 : vector<2x2x1xf32>
    %c0_52 = arith.constant 0 : index
    %c0_53 = arith.constant 0 : index
    %111 = vector.load %arg7[%c0_52, %c0_53] : memref<2x128xf32, #tpu.memory_space<vmem>>, vector<2x128xf32>
    %112 = vector.shape_cast %111 : vector<2x128xf32> to vector<1x2x128xf32>
    %113 = vector.broadcast %110 : vector<2x2x1xf32> to vector<2x2x128xf32>
    %114 = vector.broadcast %112 : vector<1x2x128xf32> to vector<2x2x128xf32>
    %115 = arith.mulf %113, %114 : vector<2x2x128xf32>
    %cst_54 = arith.constant dense<0.000000e+00> : vector<2x128xf32>
    %116 = vector.multi_reduction <add>, %115, %cst_54 [1] : vector<2x2x128xf32> to vector<2x128xf32>
    %117 = vector.shape_cast %116 : vector<2x128xf32> to vector<2x1x128xf32>
    %c0_55 = arith.constant 0 : index
    %c0_56 = arith.constant 0 : index
    %118 = vector.load %arg8[%c0_55, %c0_56] : memref<1x128xf32, #tpu.memory_space<vmem>>, vector<1x128xf32>
    %119 = vector.shape_cast %118 : vector<1x128xf32> to vector<1x1x128xf32>
    %120 = vector.broadcast %119 : vector<1x1x128xf32> to vector<2x1x128xf32>
    %121 = arith.addf %117, %120 : vector<2x1x128xf32>
    %122 = arith.negf %121 : vector<2x1x128xf32>
    %123 = math.exp %122 : vector<2x1x128xf32>
    %cst_57 = arith.constant 1.000000e+00 : f32
    %124 = vector.broadcast %cst_57 : f32 to vector<2x1x128xf32>
    %125 = arith.addf %124, %123 : vector<2x1x128xf32>
    %126 = arith.divf %124, %125 : vector<2x1x128xf32>
    %127 = vector.broadcast %126 : vector<2x1x128xf32> to vector<2x16x128xf32>
    %128 = arith.mulf %91, %127 : vector<2x16x128xf32>
    %129 = arith.addf %0, %128 : vector<2x16x128xf32>
    %c0_58 = arith.constant 0 : index
    %c0_59 = arith.constant 0 : index
    %c0_60 = arith.constant 0 : index
    %130 = vector.load %arg9[%c0_58, %c0_59, %c0_60] : memref<2x16x128xf32, #tpu.memory_space<vmem>>, vector<2x16x128xf32>
    tpu.vector_store %arg9[%c0_58, %c0_59, %c0_60], %129 {strides = array<i32>} : memref<2x16x128xf32, #tpu.memory_space<vmem>>, vector<2x16x128xf32>,
    return
  }
}

</mosaic_0001>

<llo_original>
// kernel: rcab_pallas.1
$region0: #{rcab_pallas.1}
  #allocation0 [shape = 'u32[]', space=smem, size = 0x4, offset = 0x4, fixed_abs, tag = 'smem constant byte address 0x4 - core index']
  #allocation1 [shape = 'u32[144,128]{1,0:T(1,128)}', space=vmem, size = 0x12000, scoped, tag = 'internal scratch']
  %s0 = inlined_call_operand.vmem [shape: f32[2,16,128], index: 0, kind: input, shape index: {}]
  %s1 = inlined_call_operand.vmem [shape: bf16[3,128,128], index: 1, kind: input, shape index: {}]
  %s2 = inlined_call_operand.vmem [shape: f32[1,128], index: 2, kind: input, shape index: {}]
  %s3 = inlined_call_operand.vmem [shape: bf16[3,128,128], index: 3, kind: input, shape index: {}]
  %s4 = inlined_call_operand.vmem [shape: f32[1,128], index: 4, kind: input, shape index: {}]
  %s5 = inlined_call_operand.vmem [shape: f32[2,128], index: 5, kind: input, shape index: {}]
  %s6 = inlined_call_operand.vmem [shape: f32[2,1], index: 6, kind: input, shape index: {}]
  %s7 = inlined_call_operand.vmem [shape: f32[2,128], index: 7, kind: input, shape index: {}]
  %s8 = inlined_call_operand.vmem [shape: f32[1,128], index: 8, kind: input, shape index: {}]
  %s9 = inlined_call_operand.vmem [shape: f32[2,16,128], index: 9, kind: output, shape index: {}]
  %s10 = sld [smem:[#allocation0]]
  $region46: #{rcab_pallas.1} parent=0
    _
  %s12 = ssub.s32 1, %s10
  %s13 = scalar_select 0, %s12, %s10
  // Predicated region
  $region2: #{rcab_pallas.1} parent=0 // pred_check
    _
  $region3: #{rcab_pallas.1} parent=0 // pred_check_branch
    %15 = sbr.rel (0) target = $region5
  $region4: #{rcab_pallas.1} parent=0 // pred_region
    _
  $region5: #{rcab_pallas.1} parent=0 // pred_fallthru
    _
  // Predicated region
  $region6: #{rcab_pallas.1} parent=0 // pred_check
    _
  $region7: #{rcab_pallas.1} parent=0 // pred_check_branch
    %17 = sbr.rel (0) target = $region9
  $region8: #{rcab_pallas.1} parent=0 // pred_region
    _
  $region9: #{rcab_pallas.1} parent=0 // pred_fallthru
    _
  // Predicated region
  $region10: #{rcab_pallas.1} parent=0 // pred_check
    _
  $region11: #{rcab_pallas.1} parent=0 // pred_check_branch
    %19 = sbr.rel (0) target = $region13
  $region12: #{rcab_pallas.1} parent=0 // pred_region
    _
  $region13: #{rcab_pallas.1} parent=0 // pred_fallthru
    _
  // Predicated region
  $region14: #{rcab_pallas.1} parent=0 // pred_check
    _
  $region15: #{rcab_pallas.1} parent=0 // pred_check_branch
    %21 = sbr.rel (0) target = $region17
  $region16: #{rcab_pallas.1} parent=0 // pred_region
    _
  $region17: #{rcab_pallas.1} parent=0 // pred_fallthru
    _
  // Predicated region
  $region18: #{rcab_pallas.1} parent=0 // pred_check
    _
  $region19: #{rcab_pallas.1} parent=0 // pred_check_branch
    %23 = sbr.rel (0) target = $region21
  $region20: #{rcab_pallas.1} parent=0 // pred_region
    _
  $region21: #{rcab_pallas.1} parent=0 // pred_fallthru
    _
  // Predicated region
  $region22: #{rcab_pallas.1} parent=0 // pred_check
    _
  $region23: #{rcab_pallas.1} parent=0 // pred_check_branch
    %25 = sbr.rel (0) target = $region25
  $region24: #{rcab_pallas.1} parent=0 // pred_region
    _
  $region25: #{rcab_pallas.1} parent=0 // pred_fallthru
    _
  // Predicated region
  $region26: #{rcab_pallas.1} parent=0 // pred_check
    _
  $region27: #{rcab_pallas.1} parent=0 // pred_check_branch
    %27 = sbr.rel (0) target = $region29
  $region28: #{rcab_pallas.1} parent=0 // pred_region
    _
  $region29: #{rcab_pallas.1} parent=0 // pred_fallthru
    _
  // Predicated region
  $region30: #{rcab_pallas.1} parent=0 // pred_check
    _
  $region31: #{rcab_pallas.1} parent=0 // pred_check_branch
    %29 = sbr.rel (0) target = $region33
  $region32: #{rcab_pallas.1} parent=0 // pred_region
    _
  $region33: #{rcab_pallas.1} parent=0 // pred_fallthru
    _
  // Predicated region
  $region34: #{rcab_pallas.1} parent=0 // pred_check
    _
  $region35: #{rcab_pallas.1} parent=0 // pred_check_branch
    %31 = sbr.rel (0) target = $region37
  $region36: #{rcab_pallas.1} parent=0 // pred_region
    _
  $region37: #{rcab_pallas.1} parent=0 // pred_fallthru
    _
  %v33 = vld [vmem:[%s0] sm:$0xff]
  %v34 = vld [vmem:[%s0 + $0x8] sm:$0xff]
  %v35 = vld [vmem:[%s0 + $0x10] sm:$0xff]
  %v36 = vld [vmem:[%s0 + $0x18] sm:$0xff]
  %v37 = vlaneseq
  %v38 = vshrl.u32 %v37, 7
  %v39 = vadd.s32 %v38, 8
  %v40 = vadd.s32 %v38, 16
  %v41 = vadd.s32 %v38, 24
  %vm42 = vcmp.lt.s32.totalorder %v38, 0
  %v43 = vsub.s32 0, %v38
  %v44 = vsel %vm42, %v43, %v38
  %v45 = vshrl.u32 %v44, 4
  %v46 = vand.u32 %v44, 15
  %v47 = vsub.s32 0, %v46
  %v48 = vsel %vm42, %v47, %v46
  %vm49 = vcmp.lt.s32.totalorder %v39, 0
  %v50 = vsub.s32 0, %v39
  %v51 = vsel %vm49, %v50, %v39
  %v52 = vshrl.u32 %v51, 4
  %v53 = vand.u32 %v51, 15
  %v54 = vsub.s32 0, %v53
  %v55 = vsel %vm49, %v54, %v53
  %vm56 = vcmp.lt.s32.totalorder %v40, 0
  %v57 = vsub.s32 0, %v40
  %v58 = vsel %vm56, %v57, %v40
  %v59 = vshrl.u32 %v58, 4
  %v60 = vand.u32 %v58, 15
  %v61 = vsub.s32 0, %v60
  %v62 = vsel %vm56, %v61, %v60
  %vm63 = vcmp.lt.s32.totalorder %v41, 0
  %v64 = vsub.s32 0, %v41
  %v65 = vsel %vm63, %v64, %v41
  %v66 = vshrl.u32 %v65, 4
  %v67 = vand.u32 %v65, 15
  %v68 = vsub.s32 0, %v67
  %v69 = vsel %vm63, %v68, %v67
  %vm70 = vcmp.ne.s32.totalorder %v48, 0
  %vm71 = vcmp.ne.s32.totalorder %v55, 0
  %vm72 = vcmp.ne.s32.totalorder %v62, 0
  %vm73 = vcmp.ne.s32.totalorder %v69, 0
  %vm74 = vcmp.lt.s32.totalorder %v48, 0
  %vm75 = vcmp.lt.s32.totalorder %v55, 0
  %vm76 = vcmp.lt.s32.totalorder %v62, 0
  %vm77 = vcmp.lt.s32.totalorder %v69, 0
  %vm78 = vmand %vm74, %vm70
  %vm79 = vmand %vm75, %vm71
  %vm80 = vmand %vm76, %vm72
  %vm81 = vmand %vm77, %vm73
  %v82 = vadd.s32 %v48, 16
  %v83 = vadd.s32 %v55, 16
  %v84 = vadd.s32 %v62, 16
  %v85 = vadd.s32 %v69, 16
  %v86 = vsel %vm78, %v82, %v48
  %v87 = vsel %vm79, %v83, %v55
  %v88 = vsel %vm80, %v84, %v62
  %v89 = vsel %vm81, %v85, %v69
  %vm90 = vcmp.eq.s32.totalorder %v86, 0
  %vm91 = vcmp.eq.s32.totalorder %v87, 0
  %vm92 = vcmp.eq.s32.totalorder %v88, 0
  %vm93 = vcmp.eq.s32.totalorder %v89, 0
  %vm94 = vcmp.eq.s32.totalorder %v86, 15
  %vm95 = vcmp.eq.s32.totalorder %v87, 15
  %vm96 = vcmp.eq.s32.totalorder %v88, 15
  %vm97 = vcmp.eq.s32.totalorder %v89, 15
  %v98 = vrot.slane %v33, 7
  %v99 = vrot.slane %v34, 7
  %v100 = vrot.slane %v35, 7
  %v101 = vrot.slane %v36, 7
  %vm102 = vcmp.lt.s32.totalorder %v38, 1
  %v103 = vsel %vm102, %v100, %v101
  %v104 = vsel %vm102, %v99, %v100
  %v105 = vsel %vm102, %v98, %v99
  %v106 = vsel %vm102, %v101, %v98
  %v107 = vsel %vm90, 0.0, %v106
  %v108 = vsel %vm91, 0.0, %v105
  %v109 = vsel %vm92, 0.0, %v104
  %v110 = vsel %vm93, 0.0, %v103
  %v111 = vrot.slane %v33, 1
  %v112 = vrot.slane %v34, 1
  %v113 = vrot.slane %v35, 1
  %v114 = vrot.slane %v36, 1
  %vm115 = vcmp.lt.s32.totalorder %v38, 7
  %v116 = vsel %vm115, %v113, %v114
  %v117 = vsel %vm115, %v112, %v113
  %v118 = vsel %vm115, %v111, %v112
  %v119 = vsel %vm115, %v114, %v111
  %v120 = vsel %vm94, 0.0, %v118
  %v121 = vsel %vm95, 0.0, %v117
  %v122 = vsel %vm96, 0.0, %v116
  %v123 = vsel %vm97, 0.0, %v119
  %v124 = vpack.c.bf16 %v108, %v107
  %v125 = vpack.c.bf16 %v110, %v109
  %v126 = vld [vmem:[%s1] sm:$0xf]
  %v127 = vld [vmem:[%s1 + $0x4] sm:$0xf]
  %v128 = vld [vmem:[%s1 + $0x8] sm:$0xf]
  %v129 = vld [vmem:[%s1 + $0xc] sm:$0xf]
  %v130 = vld [vmem:[%s1 + $0x10] sm:$0xf]
  %v131 = vld [vmem:[%s1 + $0x14] sm:$0xf]
  %v132 = vld [vmem:[%s1 + $0x18] sm:$0xf]
  %v133 = vld [vmem:[%s1 + $0x1c] sm:$0xf]
  %v134 = vld [vmem:[%s1 + $0x20] sm:$0xf]
  %v135 = vld [vmem:[%s1 + $0x24] sm:$0xf]
  %v136 = vld [vmem:[%s1 + $0x28] sm:$0xf]
  %v137 = vld [vmem:[%s1 + $0x2c] sm:$0xf]
  %v138 = vld [vmem:[%s1 + $0x30] sm:$0xf]
  %v139 = vld [vmem:[%s1 + $0x34] sm:$0xf]
  %v140 = vld [vmem:[%s1 + $0x38] sm:$0xf]
  %v141 = vld [vmem:[%s1 + $0x3c] sm:$0xf]
  %v142 = vpack.c.bf16 %v34, %v33
  %v143 = vpack.c.bf16 %v36, %v35
  %s144 = scalar_lea.vmem %s1, 64
  %v145 = vld [vmem:[%s144] sm:$0xf]
  %v146 = vld [vmem:[%s144 + $0x4] sm:$0xf]
  %v147 = vld [vmem:[%s144 + $0x8] sm:$0xf]
  %v148 = vld [vmem:[%s144 + $0xc] sm:$0xf]
  %v149 = vld [vmem:[%s144 + $0x10] sm:$0xf]
  %v150 = vld [vmem:[%s144 + $0x14] sm:$0xf]
  %v151 = vld [vmem:[%s144 + $0x18] sm:$0xf]
  %v152 = vld [vmem:[%s144 + $0x1c] sm:$0xf]
  %v153 = vld [vmem:[%s144 + $0x20] sm:$0xf]
  %v154 = vld [vmem:[%s144 + $0x24] sm:$0xf]
  %v155 = vld [vmem:[%s144 + $0x28] sm:$0xf]
  %v156 = vld [vmem:[%s144 + $0x2c] sm:$0xf]
  %v157 = vld [vmem:[%s144 + $0x30] sm:$0xf]
  %v158 = vld [vmem:[%s144 + $0x34] sm:$0xf]
  %v159 = vld [vmem:[%s144 + $0x38] sm:$0xf]
  %v160 = vld [vmem:[%s144 + $0x3c] sm:$0xf]
  %v177 = vunpack.c.l.b16 %v145
  %v178 = vunpack.c.l.b16 %v146
  %v179 = vunpack.c.l.b16 %v147
  %v180 = vunpack.c.l.b16 %v148
  %v181 = vunpack.c.l.b16 %v149
  %v182 = vunpack.c.l.b16 %v150
  %v183 = vunpack.c.l.b16 %v151
  %v184 = vunpack.c.l.b16 %v152
  %v185 = vunpack.c.l.b16 %v153
  %v186 = vunpack.c.l.b16 %v154
  %v187 = vunpack.c.l.b16 %v155
  %v188 = vunpack.c.l.b16 %v156
  %v189 = vunpack.c.l.b16 %v157
  %v190 = vunpack.c.l.b16 %v158
  %v191 = vunpack.c.l.b16 %v159
  %v192 = vunpack.c.l.b16 %v160
  %v193 = vpack.c.b16 %v178, %v177
  %v194 = vpack.c.b16 %v180, %v179
  %v195 = vpack.c.b16 %v182, %v181
  %v196 = vpack.c.b16 %v184, %v183
  %v197 = vpack.c.b16 %v186, %v185
  %v198 = vpack.c.b16 %v188, %v187
  %v199 = vpack.c.b16 %v190, %v189
  %v200 = vpack.c.b16 %v192, %v191
  %209 = vmatprep.subr.bf16.mxu0 0
  %210 = vmatpush1.bf16.msra.mxu0 %v193
  %211 = vmatprep.subr.bf16.mxu0 0
  %212 = vmatpush1.bf16.msra.mxu0 %v194
  %213 = vmatprep.subr.bf16.mxu0 0
  %214 = vmatpush1.bf16.msra.mxu0 %v195
  %215 = vmatprep.subr.bf16.mxu0 0
  %216 = vmatpush1.bf16.msra.mxu0 %v196
  %217 = vmatprep.subr.bf16.mxu0 0
  %218 = vmatpush1.bf16.msra.mxu0 %v197
  %219 = vmatprep.subr.bf16.mxu0 0
  %220 = vmatpush1.bf16.msra.mxu0 %v198
  %221 = vmatprep.subr.bf16.mxu0 0
  %222 = vmatpush1.bf16.msra.mxu0 %v199
  %223 = vmatprep.subr.bf16.mxu0 0
  %224 = vmatpush1.bf16.msra.mxu0 %v200
  %225 = vmatprep.subr.bf16.mxu0 0
  %226 = vmatpush1.bf16.msra.mxu0 0
  %227 = vmatprep.subr.bf16.mxu0 0
  %228 = vmatpush1.bf16.msra.mxu0 0
  %229 = vmatprep.subr.bf16.mxu0 0
  %230 = vmatpush1.bf16.msra.mxu0 0
  %231 = vmatprep.subr.bf16.mxu0 0
  %232 = vmatpush1.bf16.msra.mxu0 0
  %233 = vmatprep.subr.bf16.mxu0 0
  %234 = vmatpush1.bf16.msra.mxu0 0
  %235 = vmatprep.subr.bf16.mxu0 0
  %236 = vmatpush1.bf16.msra.mxu0 0
  %237 = vmatprep.subr.bf16.mxu0 0
  %238 = vmatpush1.bf16.msra.mxu0 0
  %239 = vmatprep.subr.bf16.mxu0 0
  %240 = vmatpush1.bf16.msra.mxu0 0
  %241 = vmatprep.mubr.bf16.mxu0 0
  %242 = vmatmul.mubr.bf16.gmra.mrb[0].mxu0 %v142
  %v243 = vpop.f32.mrb[0].mxu0
  %v244 = vadd.f32 0.0, %v243
  %v245 = vpop.f32.mrb[0].mxu0
  %v246 = vpop.f32.mrb[0].mxu0
  %v247 = vadd.f32 0.0, %v246
  %v248 = vpop.f32.mrb[0].mxu0
  %249 = vmatprep.mubr.bf16.mxu0 0
  %250 = vmatmul.mubr.bf16.gmra.mrb[0].mxu0 %v143
  %v251 = vpop.f32.mrb[0].mxu0
  %v252 = vadd.f32 0.0, %v251
  %v253 = vpop.f32.mrb[0].mxu0
  %v254 = vpop.f32.mrb[0].mxu0
  %v255 = vadd.f32 0.0, %v254
  %v256 = vpop.f32.mrb[0].mxu0
  %257 = vdwg.mxu0
  %v274 = vunpack.c.l.b16 %v126
  %v275 = vunpack.c.l.b16 %v127
  %v276 = vunpack.c.l.b16 %v128
  %v277 = vunpack.c.l.b16 %v129
  %v278 = vunpack.c.l.b16 %v130
  %v279 = vunpack.c.l.b16 %v131
  %v280 = vunpack.c.l.b16 %v132
  %v281 = vunpack.c.l.b16 %v133
  %v282 = vunpack.c.l.b16 %v134
  %v283 = vunpack.c.l.b16 %v135
  %v284 = vunpack.c.l.b16 %v136
  %v285 = vunpack.c.l.b16 %v137
  %v286 = vunpack.c.l.b16 %v138
  %v287 = vunpack.c.l.b16 %v139
  %v288 = vunpack.c.l.b16 %v140
  %v289 = vunpack.c.l.b16 %v141
  %v290 = vpack.c.b16 %v275, %v274
  %v291 = vpack.c.b16 %v277, %v276
  %v292 = vpack.c.b16 %v279, %v278
  %v293 = vpack.c.b16 %v281, %v280
  %v294 = vpack.c.b16 %v283, %v282
  %v295 = vpack.c.b16 %v285, %v284
  %v296 = vpack.c.b16 %v287, %v286
  %v297 = vpack.c.b16 %v289, %v288
  %306 = vmatprep.subr.bf16.mxu0 0
  %307 = vmatpush1.bf16.msra.mxu0 %v290
  %308 = vmatprep.subr.bf16.mxu0 0
  %309 = vmatpush1.bf16.msra.mxu0 %v291
  %310 = vmatprep.subr.bf16.mxu0 0
  %311 = vmatpush1.bf16.msra.mxu0 %v292
  %312 = vmatprep.subr.bf16.mxu0 0
  %313 = vmatpush1.bf16.msra.mxu0 %v293
  %314 = vmatprep.subr.bf16.mxu0 0
  %315 = vmatpush1.bf16.msra.mxu0 %v294
  %316 = vmatprep.subr.bf16.mxu0 0
  %317 = vmatpush1.bf16.msra.mxu0 %v295
  %318 = vmatprep.subr.bf16.mxu0 0
  %319 = vmatpush1.bf16.msra.mxu0 %v296
  %320 = vmatprep.subr.bf16.mxu0 0
  %321 = vmatpush1.bf16.msra.mxu0 %v297
  %322 = vmatprep.subr.bf16.mxu0 0
  %323 = vmatpush1.bf16.msra.mxu0 0
  %324 = vmatprep.subr.bf16.mxu0 0
  %325 = vmatpush1.bf16.msra.mxu0 0
  %326 = vmatprep.subr.bf16.mxu0 0
  %327 = vmatpush1.bf16.msra.mxu0 0
  %328 = vmatprep.subr.bf16.mxu0 0
  %329 = vmatpush1.bf16.msra.mxu0 0
  %330 = vmatprep.subr.bf16.mxu0 0
  %331 = vmatpush1.bf16.msra.mxu0 0
  %332 = vmatprep.subr.bf16.mxu0 0
  %333 = vmatpush1.bf16.msra.mxu0 0
  %334 = vmatprep.subr.bf16.mxu0 0
  %335 = vmatpush1.bf16.msra.mxu0 0
  %336 = vmatprep.subr.bf16.mxu0 0
  %337 = vmatpush1.bf16.msra.mxu0 0
  %338 = vmatprep.mubr.bf16.mxu0 0
  %339 = vmatmul.mubr.bf16.gmra.mrb[0].mxu0 %v124
  %v340 = vpop.f32.mrb[0].mxu0
  %v341 = vadd.f32 %v244, %v340
  %v342 = vpop.f32.mrb[0].mxu0
  %v343 = vpop.f32.mrb[0].mxu0
  %v344 = vadd.f32 %v247, %v343
  %v345 = vpop.f32.mrb[0].mxu0
  %346 = vmatprep.mubr.bf16.mxu0 0
  %347 = vmatmul.mubr.bf16.gmra.mrb[0].mxu0 %v125
  %v348 = vpop.f32.mrb[0].mxu0
  %v349 = vadd.f32 %v252, %v348
  %v350 = vpop.f32.mrb[0].mxu0
  %v351 = vpop.f32.mrb[0].mxu0
  %v352 = vadd.f32 %v255, %v351
  %v353 = vpop.f32.mrb[0].mxu0
  %354 = vdwg.mxu0
  %v355 = vpack.c.bf16 %v121, %v120
  %v356 = vpack.c.bf16 %v123, %v122
  %s357 = scalar_lea.vmem %s1, 128
  %v358 = vld [vmem:[%s357] sm:$0xf]
  %v359 = vld [vmem:[%s357 + $0x4] sm:$0xf]
  %v360 = vld [vmem:[%s357 + $0x8] sm:$0xf]
  %v361 = vld [vmem:[%s357 + $0xc] sm:$0xf]
  %v362 = vld [vmem:[%s357 + $0x10] sm:$0xf]
  %v363 = vld [vmem:[%s357 + $0x14] sm:$0xf]
  %v364 = vld [vmem:[%s357 + $0x18] sm:$0xf]
  %v365 = vld [vmem:[%s357 + $0x1c] sm:$0xf]
  %v366 = vld [vmem:[%s357 + $0x20] sm:$0xf]
  %v367 = vld [vmem:[%s357 + $0x24] sm:$0xf]
  %v368 = vld [vmem:[%s357 + $0x28] sm:$0xf]
  %v369 = vld [vmem:[%s357 + $0x2c] sm:$0xf]
  %v370 = vld [vmem:[%s357 + $0x30] sm:$0xf]
  %v371 = vld [vmem:[%s357 + $0x34] sm:$0xf]
  %v372 = vld [vmem:[%s357 + $0x38] sm:$0xf]
  %v373 = vld [vmem:[%s357 + $0x3c] sm:$0xf]
  %v390 = vunpack.c.l.b16 %v358
  %v391 = vunpack.c.l.b16 %v359
  %v392 = vunpack.c.l.b16 %v360
  %v393 = vunpack.c.l.b16 %v361
  %v394 = vunpack.c.l.b16 %v362
  %v395 = vunpack.c.l.b16 %v363
  %v396 = vunpack.c.l.b16 %v364
  %v397 = vunpack.c.l.b16 %v365
  %v398 = vunpack.c.l.b16 %v366
  %v399 = vunpack.c.l.b16 %v367
  %v400 = vunpack.c.l.b16 %v368
  %v401 = vunpack.c.l.b16 %v369
  %v402 = vunpack.c.l.b16 %v370
  %v403 = vunpack.c.l.b16 %v371
  %v404 = vunpack.c.l.b16 %v372
  %v405 = vunpack.c.l.b16 %v373
  %v406 = vpack.c.b16 %v391, %v390
  %v407 = vpack.c.b16 %v393, %v392
  %v408 = vpack.c.b16 %v395, %v394
  %v409 = vpack.c.b16 %v397, %v396
  %v410 = vpack.c.b16 %v399, %v398
  %v411 = vpack.c.b16 %v401, %v400
  %v412 = vpack.c.b16 %v403, %v402
  %v413 = vpack.c.b16 %v405, %v404
  %422 = vmatprep.subr.bf16.mxu0 0
  %423 = vmatpush1.bf16.msra.mxu0 %v406
  %424 = vmatprep.subr.bf16.mxu0 0
  %425 = vmatpush1.bf16.msra.mxu0 %v407
  %426 = vmatprep.subr.bf16.mxu0 0
  %427 = vmatpush1.bf16.msra.mxu0 %v408
  %428 = vmatprep.subr.bf16.mxu0 0
  %429 = vmatpush1.bf16.msra.mxu0 %v409
  %430 = vmatprep.subr.bf16.mxu0 0
  %431 = vmatpush1.bf16.msra.mxu0 %v410
  %432 = vmatprep.subr.bf16.mxu0 0
  %433 = vmatpush1.bf16.msra.mxu0 %v411
  %434 = vmatprep.subr.bf16.mxu0 0
  %435 = vmatpush1.bf16.msra.mxu0 %v412
  %436 = vmatprep.subr.bf16.mxu0 0
  %437 = vmatpush1.bf16.msra.mxu0 %v413
  %438 = vmatprep.subr.bf16.mxu0 0
  %439 = vmatpush1.bf16.msra.mxu0 0
  %440 = vmatprep.subr.bf16.mxu0 0
  %441 = vmatpush1.bf16.msra.mxu0 0
  %442 = vmatprep.subr.bf16.mxu0 0
  %443 = vmatpush1.bf16.msra.mxu0 0
  %444 = vmatprep.subr.bf16.mxu0 0
  %445 = vmatpush1.bf16.msra.mxu0 0
  %446 = vmatprep.subr.bf16.mxu0 0
  %447 = vmatpush1.bf16.msra.mxu0 0
  %448 = vmatprep.subr.bf16.mxu0 0
  %449 = vmatpush1.bf16.msra.mxu0 0
  %450 = vmatprep.subr.bf16.mxu0 0
  %451 = vmatpush1.bf16.msra.mxu0 0
  %452 = vmatprep.subr.bf16.mxu0 0
  %453 = vmatpush1.bf16.msra.mxu0 0
  %454 = vmatprep.mubr.bf16.mxu0 0
  %455 = vmatmul.mubr.bf16.gmra.mrb[0].mxu0 %v355
  %v456 = vpop.f32.mrb[0].mxu0
  %v457 = vadd.f32 0.0, %v456
  %v458 = vpop.f32.mrb[0].mxu0
  %v459 = vpop.f32.mrb[0].mxu0
  %v460 = vadd.f32 0.0, %v459
  %v461 = vpop.f32.mrb[0].mxu0
  %462 = vmatprep.mubr.bf16.mxu0 0
  %463 = vmatmul.mubr.bf16.gmra.mrb[0].mxu0 %v356
  %v464 = vpop.f32.mrb[0].mxu0
  %v465 = vadd.f32 0.0, %v464
  %v466 = vpop.f32.mrb[0].mxu0
  %v467 = vpop.f32.mrb[0].mxu0
  %v468 = vadd.f32 0.0, %v467
  %v469 = vpop.f32.mrb[0].mxu0
  %470 = vdwg.mxu0
  %v471 = vadd.f32 %v341, %v457
  %v472 = vadd.f32 %v344, %v460
  %v473 = vadd.f32 %v349, %v465
  %v474 = vadd.f32 %v352, %v468
  %v475 = vld [vmem:[%s2] sm:$0x1]
  %v477 = vlaneseq
  %v478 = vshrl.u32 %v477, 7
  %v479 = vsub.s32 0, %v478
  %v480 = vrot.slane %v475, %v479
  %v482 = vadd.f32 %v471, %v480
  %v483 = vadd.f32 %v472, %v480
  %v484 = vadd.f32 %v473, %v480
  %v485 = vadd.f32 %v474, %v480
  %v486 = vxor.u32 %v482, 2147483648
  %v487 = vxor.u32 %v483, 2147483648
  %v488 = vxor.u32 %v484, 2147483648
  %v489 = vxor.u32 %v485, 2147483648
  %v490 = vmul.f32 %v486, 1.442695
  %v491 = vpow.pop %v490
  %v492 = vmul.f32 %v487, 1.442695
  %v493 = vpow.pop %v492
  %v494 = vmul.f32 %v488, 1.442695
  %v495 = vpow.pop %v494
  %v496 = vmul.f32 %v489, 1.442695
  %v497 = vpow.pop %v496
  %v498 = vadd.f32 %v491, 1.0
  %v499 = vadd.f32 %v493, 1.0
  %v500 = vadd.f32 %v495, 1.0
  %v501 = vadd.f32 %v497, 1.0
  %v502 = vrcp.pop %v498
  %v503 = vmul.f32 1.0, %v502
  %v504 = vrcp.pop %v499
  %v505 = vmul.f32 1.0, %v504
  %v506 = vrcp.pop %v500
  %v507 = vmul.f32 1.0, %v506
  %v508 = vrcp.pop %v501
  %v509 = vmul.f32 1.0, %v508
  %v510 = vmul.f32 %v482, %v503
  %v511 = vmul.f32 %v483, %v505
  %v512 = vmul.f32 %v484, %v507
  %v513 = vmul.f32 %v485, %v509
  %v514 = vrot.slane %v510, 7
  %v515 = vrot.slane %v511, 7
  %v516 = vrot.slane %v512, 7
  %v517 = vrot.slane %v513, 7
  %v518 = vsel %vm102, %v516, %v517
  %v519 = vsel %vm102, %v515, %v516
  %v520 = vsel %vm102, %v514, %v515
  %v521 = vsel %vm102, %v517, %v514
  %v522 = vsel %vm90, 0.0, %v521
  %v523 = vsel %vm91, 0.0, %v520
  %v524 = vsel %vm92, 0.0, %v519
  %v525 = vsel %vm93, 0.0, %v518
  %v526 = vrot.slane %v510, 1
  %v527 = vrot.slane %v511, 1
  %v528 = vrot.slane %v512, 1
  %v529 = vrot.slane %v513, 1
  %v530 = vsel %vm115, %v528, %v529
  %v531 = vsel %vm115, %v527, %v528
  %v532 = vsel %vm115, %v526, %v527
  %v533 = vsel %vm115, %v529, %v526
  %v534 = vsel %vm94, 0.0, %v532
  %v535 = vsel %vm95, 0.0, %v531
  %v536 = vsel %vm96, 0.0, %v530
  %v537 = vsel %vm97, 0.0, %v533
  %v538 = vpack.c.bf16 %v523, %v522
  %v539 = vpack.c.bf16 %v525, %v524
  %v540 = vld [vmem:[%s3] sm:$0xf]
  %v541 = vld [vmem:[%s3 + $0x4] sm:$0xf]
  %v542 = vld [vmem:[%s3 + $0x8] sm:$0xf]
  %v543 = vld [vmem:[%s3 + $0xc] sm:$0xf]
  %v544 = vld [vmem:[%s3 + $0x10] sm:$0xf]
  %v545 = vld [vmem:[%s3 + $0x14] sm:$0xf]
  %v546 = vld [vmem:[%s3 + $0x18] sm:$0xf]
  %v547 = vld [vmem:[%s3 + $0x1c] sm:$0xf]
  %v548 = vld [vmem:[%s3 + $0x20] sm:$0xf]
  %v549 = vld [vmem:[%s3 + $0x24] sm:$0xf]
  %v550 = vld [vmem:[%s3 + $0x28] sm:$0xf]
  %v551 = vld [vmem:[%s3 + $0x2c] sm:$0xf]
  %v552 = vld [vmem:[%s3 + $0x30] sm:$0xf]
  %v553 = vld [vmem:[%s3 + $0x34] sm:$0xf]
  %v554 = vld [vmem:[%s3 + $0x38] sm:$0xf]
  %v555 = vld [vmem:[%s3 + $0x3c] sm:$0xf]
  %v556 = vpack.c.bf16 %v511, %v510
  %v557 = vpack.c.bf16 %v513, %v512
  %s558 = scalar_lea.vmem %s3, 64
  %v559 = vld [vmem:[%s558] sm:$0xf]
  %v560 = vld [vmem:[%s558 + $0x4] sm:$0xf]
  %v561 = vld [vmem:[%s558 + $0x8] sm:$0xf]
  %v562 = vld [vmem:[%s558 + $0xc] sm:$0xf]
  %v563 = vld [vmem:[%s558 + $0x10] sm:$0xf]
  %v564 = vld [vmem:[%s558 + $0x14] sm:$0xf]
  %v565 = vld [vmem:[%s558 + $0x18] sm:$0xf]
  %v566 = vld [vmem:[%s558 + $0x1c] sm:$0xf]
  %v567 = vld [vmem:[%s558 + $0x20] sm:$0xf]
  %v568 = vld [vmem:[%s558 + $0x24] sm:$0xf]
  %v569 = vld [vmem:[%s558 + $0x28] sm:$0xf]
  %v570 = vld [vmem:[%s558 + $0x2c] sm:$0xf]
  %v571 = vld [vmem:[%s558 + $0x30] sm:$0xf]
  %v572 = vld [vmem:[%s558 + $0x34] sm:$0xf]
  %v573 = vld [vmem:[%s558 + $0x38] sm:$0xf]
  %v574 = vld [vmem:[%s558 + $0x3c] sm:$0xf]
  %v591 = vunpack.c.l.b16 %v559
  %v592 = vunpack.c.l.b16 %v560
  %v593 = vunpack.c.l.b16 %v561
  %v594 = vunpack.c.l.b16 %v562
  %v595 = vunpack.c.l.b16 %v563
  %v596 = vunpack.c.l.b16 %v564
  %v597 = vunpack.c.l.b16 %v565
  %v598 = vunpack.c.l.b16 %v566
  %v599 = vunpack.c.l.b16 %v567
  %v600 = vunpack.c.l.b16 %v568
  %v601 = vunpack.c.l.b16 %v569
  %v602 = vunpack.c.l.b16 %v570
  %v603 = vunpack.c.l.b16 %v571
  %v604 = vunpack.c.l.b16 %v572
  %v605 = vunpack.c.l.b16 %v573
  %v606 = vunpack.c.l.b16 %v574
  %v607 = vpack.c.b16 %v592, %v591
  %v608 = vpack.c.b16 %v594, %v593
  %v609 = vpack.c.b16 %v596, %v595
  %v610 = vpack.c.b16 %v598, %v597
  %v611 = vpack.c.b16 %v600, %v599
  %v612 = vpack.c.b16 %v602, %v601
  %v613 = vpack.c.b16 %v604, %v603
  %v614 = vpack.c.b16 %v606, %v605
  %623 = vmatprep.subr.bf16.mxu0 0
  %624 = vmatpush1.bf16.msra.mxu0 %v607
  %625 = vmatprep.subr.bf16.mxu0 0
  %626 = vmatpush1.bf16.msra.mxu0 %v608
  %627 = vmatprep.subr.bf16.mxu0 0
  %628 = vmatpush1.bf16.msra.mxu0 %v609
  %629 = vmatprep.subr.bf16.mxu0 0
  %630 = vmatpush1.bf16.msra.mxu0 %v610
  %631 = vmatprep.subr.bf16.mxu0 0
  %632 = vmatpush1.bf16.msra.mxu0 %v611
  %633 = vmatprep.subr.bf16.mxu0 0
  %634 = vmatpush1.bf16.msra.mxu0 %v612
  %635 = vmatprep.subr.bf16.mxu0 0
  %636 = vmatpush1.bf16.msra.mxu0 %v613
  %637 = vmatprep.subr.bf16.mxu0 0
  %638 = vmatpush1.bf16.msra.mxu0 %v614
  %639 = vmatprep.subr.bf16.mxu0 0
  %640 = vmatpush1.bf16.msra.mxu0 0
  %641 = vmatprep.subr.bf16.mxu0 0
  %642 = vmatpush1.bf16.msra.mxu0 0
  %643 = vmatprep.subr.bf16.mxu0 0
  %644 = vmatpush1.bf16.msra.mxu0 0
  %645 = vmatprep.subr.bf16.mxu0 0
  %646 = vmatpush1.bf16.msra.mxu0 0
  %647 = vmatprep.subr.bf16.mxu0 0
  %648 = vmatpush1.bf16.msra.mxu0 0
  %649 = vmatprep.subr.bf16.mxu0 0
  %650 = vmatpush1.bf16.msra.mxu0 0
  %651 = vmatprep.subr.bf16.mxu0 0
  %652 = vmatpush1.bf16.msra.mxu0 0
  %653 = vmatprep.subr.bf16.mxu0 0
  %654 = vmatpush1.bf16.msra.mxu0 0
  %655 = vmatprep.mubr.bf16.mxu0 0
  %656 = vmatmul.mubr.bf16.gmra.mrb[0].mxu0 %v556
  %v657 = vpop.f32.mrb[0].mxu0
  %v658 = vadd.f32 0.0, %v657
  %v659 = vpop.f32.mrb[0].mxu0
  %v660 = vpop.f32.mrb[0].mxu0
  %v661 = vadd.f32 0.0, %v660
  %v662 = vpop.f32.mrb[0].mxu0
  %663 = vmatprep.mubr.bf16.mxu0 0
  %664 = vmatmul.mubr.bf16.gmra.mrb[0].mxu0 %v557
  %v665 = vpop.f32.mrb[0].mxu0
  %v666 = vadd.f32 0.0, %v665
  %v667 = vpop.f32.mrb[0].mxu0
  %v668 = vpop.f32.mrb[0].mxu0
  %v669 = vadd.f32 0.0, %v668
  %v670 = vpop.f32.mrb[0].mxu0
  %671 = vdwg.mxu0
  %v688 = vunpack.c.l.b16 %v540
  %v689 = vunpack.c.l.b16 %v541
  %v690 = vunpack.c.l.b16 %v542
  %v691 = vunpack.c.l.b16 %v543
  %v692 = vunpack.c.l.b16 %v544
  %v693 = vunpack.c.l.b16 %v545
  %v694 = vunpack.c.l.b16 %v546
  %v695 = vunpack.c.l.b16 %v547
  %v696 = vunpack.c.l.b16 %v548
  %v697 = vunpack.c.l.b16 %v549
  %v698 = vunpack.c.l.b16 %v550
  %v699 = vunpack.c.l.b16 %v551
  %v700 = vunpack.c.l.b16 %v552
  %v701 = vunpack.c.l.b16 %v553
  %v702 = vunpack.c.l.b16 %v554
  %v703 = vunpack.c.l.b16 %v555
  %v704 = vpack.c.b16 %v689, %v688
  %v705 = vpack.c.b16 %v691, %v690
  %v706 = vpack.c.b16 %v693, %v692
  %v707 = vpack.c.b16 %v695, %v694
  %v708 = vpack.c.b16 %v697, %v696
  %v709 = vpack.c.b16 %v699, %v698
  %v710 = vpack.c.b16 %v701, %v700
  %v711 = vpack.c.b16 %v703, %v702
  %720 = vmatprep.subr.bf16.mxu0 0
  %721 = vmatpush1.bf16.msra.mxu0 %v704
  %722 = vmatprep.subr.bf16.mxu0 0
  %723 = vmatpush1.bf16.msra.mxu0 %v705
  %724 = vmatprep.subr.bf16.mxu0 0
  %725 = vmatpush1.bf16.msra.mxu0 %v706
  %726 = vmatprep.subr.bf16.mxu0 0
  %727 = vmatpush1.bf16.msra.mxu0 %v707
  %728 = vmatprep.subr.bf16.mxu0 0
  %729 = vmatpush1.bf16.msra.mxu0 %v708
  %730 = vmatprep.subr.bf16.mxu0 0
  %731 = vmatpush1.bf16.msra.mxu0 %v709
  %732 = vmatprep.subr.bf16.mxu0 0
  %733 = vmatpush1.bf16.msra.mxu0 %v710
  %734 = vmatprep.subr.bf16.mxu0 0
  %735 = vmatpush1.bf16.msra.mxu0 %v711
  %736 = vmatprep.subr.bf16.mxu0 0
  %737 = vmatpush1.bf16.msra.mxu0 0
  %738 = vmatprep.subr.bf16.mxu0 0
  %739 = vmatpush1.bf16.msra.mxu0 0
  %740 = vmatprep.subr.bf16.mxu0 0
  %741 = vmatpush1.bf16.msra.mxu0 0
  %742 = vmatprep.subr.bf16.mxu0 0
  %743 = vmatpush1.bf16.msra.mxu0 0
  %744 = vmatprep.subr.bf16.mxu0 0
  %745 = vmatpush1.bf16.msra.mxu0 0
  %746 = vmatprep.subr.bf16.mxu0 0
  %747 = vmatpush1.bf16.msra.mxu0 0
  %748 = vmatprep.subr.bf16.mxu0 0
  %749 = vmatpush1.bf16.msra.mxu0 0
  %750 = vmatprep.subr.bf16.mxu0 0
  %751 = vmatpush1.bf16.msra.mxu0 0
  %752 = vmatprep.mubr.bf16.mxu0 0
  %753 = vmatmul.mubr.bf16.gmra.mrb[0].mxu0 %v538
  %v754 = vpop.f32.mrb[0].mxu0
  %v755 = vadd.f32 %v658, %v754
  %v756 = vpop.f32.mrb[0].mxu0
  %v757 = vpop.f32.mrb[0].mxu0
  %v758 = vadd.f32 %v661, %v757
  %v759 = vpop.f32.mrb[0].mxu0
  %760 = vmatprep.mubr.bf16.mxu0 0
  %761 = vmatmul.mubr.bf16.gmra.mrb[0].mxu0 %v539
  %v762 = vpop.f32.mrb[0].mxu0
  %v763 = vadd.f32 %v666, %v762
  %v764 = vpop.f32.mrb[0].mxu0
  %v765 = vpop.f32.mrb[0].mxu0
  %v766 = vadd.f32 %v669, %v765
  %v767 = vpop.f32.mrb[0].mxu0
  %768 = vdwg.mxu0
  %v769 = vpack.c.bf16 %v535, %v534
  %v770 = vpack.c.bf16 %v537, %v536
  %s771 = scalar_lea.vmem %s3, 128
  %v772 = vld [vmem:[%s771] sm:$0xf]
  %v773 = vld [vmem:[%s771 + $0x4] sm:$0xf]
  %v774 = vld [vmem:[%s771 + $0x8] sm:$0xf]
  %v775 = vld [vmem:[%s771 + $0xc] sm:$0xf]
  %v776 = vld [vmem:[%s771 + $0x10] sm:$0xf]
  %v777 = vld [vmem:[%s771 + $0x14] sm:$0xf]
  %v778 = vld [vmem:[%s771 + $0x18] sm:$0xf]
  %v779 = vld [vmem:[%s771 + $0x1c] sm:$0xf]
  %v780 = vld [vmem:[%s771 + $0x20] sm:$0xf]
  %v781 = vld [vmem:[%s771 + $0x24] sm:$0xf]
  %v782 = vld [vmem:[%s771 + $0x28] sm:$0xf]
  %v783 = vld [vmem:[%s771 + $0x2c] sm:$0xf]
  %v784 = vld [vmem:[%s771 + $0x30] sm:$0xf]
  %v785 = vld [vmem:[%s771 + $0x34] sm:$0xf]
  %v786 = vld [vmem:[%s771 + $0x38] sm:$0xf]
  %v787 = vld [vmem:[%s771 + $0x3c] sm:$0xf]
  %v804 = vunpack.c.l.b16 %v772
  %v805 = vunpack.c.l.b16 %v773
  %v806 = vunpack.c.l.b16 %v774
  %v807 = vunpack.c.l.b16 %v775
  %v808 = vunpack.c.l.b16 %v776
  %v809 = vunpack.c.l.b16 %v777
  %v810 = vunpack.c.l.b16 %v778
  %v811 = vunpack.c.l.b16 %v779
  %v812 = vunpack.c.l.b16 %v780
  %v813 = vunpack.c.l.b16 %v781
  %v814 = vunpack.c.l.b16 %v782
  %v815 = vunpack.c.l.b16 %v783
  %v816 = vunpack.c.l.b16 %v784
  %v817 = vunpack.c.l.b16 %v785
  %v818 = vunpack.c.l.b16 %v786
  %v819 = vunpack.c.l.b16 %v787
  %v820 = vpack.c.b16 %v805, %v804
  %v821 = vpack.c.b16 %v807, %v806
  %v822 = vpack.c.b16 %v809, %v808
  %v823 = vpack.c.b16 %v811, %v810
  %v824 = vpack.c.b16 %v813, %v812
  %v825 = vpack.c.b16 %v815, %v814
  %v826 = vpack.c.b16 %v817, %v816
  %v827 = vpack.c.b16 %v819, %v818
  %836 = vmatprep.subr.bf16.mxu0 0
  %837 = vmatpush1.bf16.msra.mxu0 %v820
  %838 = vmatprep.subr.bf16.mxu0 0
  %839 = vmatpush1.bf16.msra.mxu0 %v821
  %840 = vmatprep.subr.bf16.mxu0 0
  %841 = vmatpush1.bf16.msra.mxu0 %v822
  %842 = vmatprep.subr.bf16.mxu0 0
  %843 = vmatpush1.bf16.msra.mxu0 %v823
  %844 = vmatprep.subr.bf16.mxu0 0
  %845 = vmatpush1.bf16.msra.mxu0 %v824
  %846 = vmatprep.subr.bf16.mxu0 0
  %847 = vmatpush1.bf16.msra.mxu0 %v825
  %848 = vmatprep.subr.bf16.mxu0 0
  %849 = vmatpush1.bf16.msra.mxu0 %v826
  %850 = vmatprep.subr.bf16.mxu0 0
  %851 = vmatpush1.bf16.msra.mxu0 %v827
  %852 = vmatprep.subr.bf16.mxu0 0
  %853 = vmatpush1.bf16.msra.mxu0 0
  %854 = vmatprep.subr.bf16.mxu0 0
  %855 = vmatpush1.bf16.msra.mxu0 0
  %856 = vmatprep.subr.bf16.mxu0 0
  %857 = vmatpush1.bf16.msra.mxu0 0
  %858 = vmatprep.subr.bf16.mxu0 0
  %859 = vmatpush1.bf16.msra.mxu0 0
  %860 = vmatprep.subr.bf16.mxu0 0
  %861 = vmatpush1.bf16.msra.mxu0 0
  %862 = vmatprep.subr.bf16.mxu0 0
  %863 = vmatpush1.bf16.msra.mxu0 0
  %864 = vmatprep.subr.bf16.mxu0 0
  %865 = vmatpush1.bf16.msra.mxu0 0
  %866 = vmatprep.subr.bf16.mxu0 0
  %867 = vmatpush1.bf16.msra.mxu0 0
  %868 = vmatprep.mubr.bf16.mxu0 0
  %869 = vmatmul.mubr.bf16.gmra.mrb[0].mxu0 %v769
  %v870 = vpop.f32.mrb[0].mxu0
  %v871 = vadd.f32 0.0, %v870
  %v872 = vpop.f32.mrb[0].mxu0
  %v873 = vpop.f32.mrb[0].mxu0
  %v874 = vadd.f32 0.0, %v873
  %v875 = vpop.f32.mrb[0].mxu0
  %876 = vmatprep.mubr.bf16.mxu0 0
  %877 = vmatmul.mubr.bf16.gmra.mrb[0].mxu0 %v770
  %v878 = vpop.f32.mrb[0].mxu0
  %v879 = vadd.f32 0.0, %v878
  %v880 = vpop.f32.mrb[0].mxu0
  %v881 = vpop.f32.mrb[0].mxu0
  %v882 = vadd.f32 0.0, %v881
  %v883 = vpop.f32.mrb[0].mxu0
  %884 = vdwg.mxu0
  %v885 = vadd.f32 %v755, %v871
  %v886 = vadd.f32 %v758, %v874
  %v887 = vadd.f32 %v763, %v879
  %v888 = vadd.f32 %v766, %v882
  %v889 = vld [vmem:[%s4] sm:$0x1]
  %v891 = vlaneseq
  %v892 = vshrl.u32 %v891, 7
  %v893 = vsub.s32 0, %v892
  %v894 = vrot.slane %v889, %v893
  %v896 = vadd.f32 %v885, %v894
  %v897 = vadd.f32 %v886, %v894
  %v898 = vadd.f32 %v887, %v894
  %v899 = vadd.f32 %v888, %v894
  %v900 = vadd.f32 %v896, %v897
  %v901 = vrot.slane %v900, 4
  %v902 = vadd.f32 %v900, %v901
  %v903 = vrot.slane %v902, 2
  %v904 = vadd.f32 %v902, %v903
  %v905 = vrot.slane %v904, 1
  %v906 = vadd.f32 %v904, %v905
  %v907 = vadd.f32 %v898, %v899
  %v908 = vrot.slane %v907, 4
  %v909 = vadd.f32 %v907, %v908
  %v910 = vrot.slane %v909, 2
  %v911 = vadd.f32 %v909, %v910
  %v912 = vrot.slane %v911, 1
  %v913 = vadd.f32 %v911, %v912
  %v914 = vld [vmem:[%s5] sm:$0x3]
  %v915 = vmul.f32 %v906, %v914
  %v916 = vmul.f32 %v913, %v914
  %vm917 = vcmask 1041408
  %v918 = vsel %vm917, %v915, 0.0
  %919 = vadd.xlane.f32.xlu0 %v918
  %v920 = vpop.xlane.xlu0 %919
  %v921 = vsel %vm917, %v916, 0.0
  %922 = vadd.xlane.f32.xlu0 %v921
  %v923 = vpop.xlane.xlu0 %922
  %v924 = vld [vmem:[%s6] sm:$0x3]
  %v925 = vadd.f32 %v920, %v924
  %v926 = vadd.f32 %v923, %v924
  %v927 = vxor.u32 %v925, 2147483648
  %v928 = vxor.u32 %v926, 2147483648
  %v929 = vmul.f32 %v927, 1.442695
  %v930 = vpow.pop %v929
  %v931 = vmul.f32 %v928, 1.442695
  %v932 = vpow.pop %v931
  %v933 = vadd.f32 %v930, 1.0
  %v934 = vadd.f32 %v932, 1.0
  %v935 = vrcp.pop %v933
  %v936 = vmul.f32 1.0, %v935
  %v937 = vrcp.pop %v934
  %v938 = vmul.f32 1.0, %v937
  %v939 = vmul.f32 %v925, %v936
  %v940 = vmul.f32 %v926, %v938
  %v941 = vld [vmem:[%s7] sm:$0x3]
  %943 = vset.pattern.permute.xlu0 0
  %944 = vperm.xlu0 %943, %v939
  %v945 = vpop.permute.xlu0 %944
  %948 = vset.pattern.permute.xlu0 0
  %949 = vperm.xlu0 %948, %v940
  %v950 = vpop.permute.xlu0 %949
  %v952 = vmul.f32 %v945, %v941
  %v953 = vmul.f32 %v950, %v941
  %v954 = vsel %vm917, %v952, 0.0
  %v955 = vrot.slane %v954, 4
  %v956 = vadd.f32 %v954, %v955
  %v957 = vrot.slane %v956, 2
  %v958 = vadd.f32 %v956, %v957
  %v959 = vrot.slane %v958, 1
  %v960 = vadd.f32 %v958, %v959
  %v961 = vsel %vm917, %v953, 0.0
  %v962 = vrot.slane %v961, 4
  %v963 = vadd.f32 %v961, %v962
  %v964 = vrot.slane %v963, 2
  %v965 = vadd.f32 %v963, %v964
  %v966 = vrot.slane %v965, 1
  %v967 = vadd.f32 %v965, %v966
  %v968 = vld [vmem:[%s8] sm:$0x1]
  %v969 = vadd.f32 %v960, %v968
  %v970 = vadd.f32 %v967, %v968
  %v971 = vxor.u32 %v969, 2147483648
  %v972 = vxor.u32 %v970, 2147483648
  %v973 = vmul.f32 %v971, 1.442695
  %v974 = vpow.pop %v973
  %v975 = vmul.f32 %v972, 1.442695
  %v976 = vpow.pop %v975
  %v977 = vadd.f32 %v974, 1.0
  %v978 = vadd.f32 %v976, 1.0
  %v979 = vrcp.pop %v977
  %v980 = vmul.f32 1.0, %v979
  %v981 = vrcp.pop %v978
  %v982 = vmul.f32 1.0, %v981
  %v983 = vlaneseq
  %v984 = vshrl.u32 %v983, 7
  %v985 = vsub.s32 0, %v984
  %v986 = vrot.slane %v980, %v985
  %v987 = vlaneseq
  %v988 = vshrl.u32 %v987, 7
  %v989 = vsub.s32 0, %v988
  %v990 = vrot.slane %v982, %v989
  %v991 = vmul.f32 %v896, %v986
  %v992 = vmul.f32 %v897, %v986
  %v993 = vmul.f32 %v898, %v990
  %v994 = vmul.f32 %v899, %v990
  %v995 = vadd.f32 %v33, %v991
  %v996 = vadd.f32 %v34, %v992
  %v997 = vadd.f32 %v35, %v993
  %v998 = vadd.f32 %v36, %v994
  %999 = vst [vmem:[%s9] sm:$0xff] %v995
  %1000 = vst [vmem:[%s9 + $0x8] sm:$0xff] %v996
  %1001 = vst [vmem:[%s9 + $0x10] sm:$0xff] %v997
  %1002 = vst [vmem:[%s9 + $0x18] sm:$0xff] %v998
  // Predicated region
  $region38: #{rcab_pallas.1} parent=0 // pred_check
    _
  $region39: #{rcab_pallas.1} parent=0 // pred_check_branch
    %1004 = sbr.rel (0) target = $region41
  $region40: #{rcab_pallas.1} parent=0 // pred_region
    _
  $region41: #{rcab_pallas.1} parent=0 // pred_fallthru
    _
  // Predicated region
  $region42: #{rcab_pallas.1} parent=0 // pred_check
    _
  $region43: #{rcab_pallas.1} parent=0 // pred_check_branch
    %1006 = sbr.rel (0) target = $region45
  $region44: #{rcab_pallas.1} parent=0 // pred_region
    _
  $region45: #{rcab_pallas.1} parent=0 // pred_fallthru
    _

</llo_original>
